<compile_context>
chip_gen: v6e
topology: v6e:2x2x1
jax: 0.10.0
libtpu: 0.0.40
codegen_flags: <defaults>
</compile_context>

<pallas_src>
import functools
import math

import jax
import jax.numpy as jnp
from jax.experimental import pallas as pl
from jax.experimental.pallas import tpu as pltpu


def _round_up(n, m):
    return ((n + m - 1) // m) * m


def _divisor_tile(total, want, align):
    """Largest multiple of `align` that is <= max(want, align) and divides `total`.

    `total` must itself be a multiple of `align`, so the loop terminates
    (worst case at `align`, which always divides `total`)."""
    t = max(align, (min(want, total) // align) * align)
    while total % t:
        t -= align
    return t


def _device_kind():
    try:
        return jax.devices()[0].device_kind.lower()
    except Exception:
        return ""


def _chip_defaults():
    """(tm, tn, vmem_limit_cap) per TPU generation."""
    kind = _device_kind()
    if "v7" in kind:
        # 64 MiB VMEM per TensorCore: smaller column tile + compiler headroom.
        return 512, 1024, 48 * 1024 * 1024
    # 128 MiB VMEM parts (v5e / v6e / older): big tiles, 64 MiB scoped limit.
    return 512, 2048, 64 * 1024 * 1024


def _sigmoid_f32(h):
    # sigmoid(h) = 1 / (1 + exp(-h)).  exp and the approximate reciprocal both
    # execute on the EUP slot, keeping the 4 VALU slots free for casts/stores.
    return pl.reciprocal(1.0 + jnp.exp(-h), approx=True)


def _ipd_kernel_tiled(x_rows_ref, x_cols_ref, o_ref):
    # x_rows_ref: (tm, D) LHS row tile; x_cols_ref: (tn, D) RHS row tile.
    # Contract D-with-D directly (no in-kernel transpose through the XLU).
    h = jax.lax.dot_general(
        x_rows_ref[...],
        x_cols_ref[...],
        dimension_numbers=(((1,), (1,)), ((), ())),
        preferred_element_type=jnp.float32,
    )
    o_ref[...] = _sigmoid_f32(h).astype(o_ref.dtype)


def _ipd_kernel_resident(x_rows_ref, x_all_ref, o_ref, *, tn):
    # x_all_ref: (Np, D) — whole RHS resident in VMEM (its block index is
    # constant across the grid, so it is DMA'd only once).  Slice the strip.
    j = pl.program_id(1)
    start = pl.multiple_of(j * tn, tn)
    x_cols = x_all_ref[pl.ds(start, tn), :]
    h = jax.lax.dot_general(
        x_rows_ref[...],
        x_cols,
        dimension_numbers=(((1,), (1,)), ((), ())),
        preferred_element_type=jnp.float32,
    )
    o_ref[...] = _sigmoid_f32(h).astype(o_ref.dtype)


@functools.partial(
    jax.jit,
    static_argnames=("dropout", "tm", "tn", "out_dtype", "rhs_resident"),
)
def inner_product_decoder(x, *, dropout=0.0, tm=None, tn=None, out_dtype=None,
                          rhs_resident=None):
    """sigmoid(x @ x.T) for x of shape (N, D), tiled over output rows & columns."""
    if dropout != 0.0:
        # TODO(synk): dropout > 0 (training mode) not implemented in-kernel.
        raise NotImplementedError("dropout > 0 not supported; module default is 0")

    N, D = x.shape
    out_dtype = x.dtype if out_dtype is None else out_dtype
    in_bytes = jnp.dtype(x.dtype).itemsize
    out_bytes = jnp.dtype(out_dtype).itemsize

    tm_want, tn_want, vmem_cap = _chip_defaults()
    tm_want = tm_want if tm is None else tm
    tn_want = tn_want if tn is None else tn

    # Padded extent: one round-up to the lane width.  Tiles are divisors of Np
    # so the grid covers the padded output exactly, and Np == N whenever N is
    # 128-aligned (no output slice-copy in that case).
    Np = _round_up(N, 128)
    tm = _divisor_tile(Np, tm_want, 8)     # sublane-aligned row tile
    tn = _divisor_tile(Np, tn_want, 128)   # lane-dense column tile

    if Np != N:
        x_p = jnp.zeros((Np, D), dtype=x.dtype).at[:N, :].set(x)
    else:
        x_p = x

    grid = (Np // tm, Np // tn)   # larger (row) axis first -> megacore shard on v7x

    # Keep the whole RHS resident in VMEM when small; otherwise stream (tn, D)
    # column tiles per grid step.
    if rhs_resident is None:
        rhs_resident = (Np * D * in_bytes) <= 4 * 1024 * 1024

    if rhs_resident:
        kernel = functools.partial(_ipd_kernel_resident, tn=tn)
        rhs_spec = pl.BlockSpec((Np, D), lambda i, j: (0, 0))
        rhs_vmem = 2 * Np * D * in_bytes
        rhs_hbm = Np * D * in_bytes                  # single pass of x
    else:
        kernel = _ipd_kernel_tiled
        rhs_spec = pl.BlockSpec((tn, D), lambda i, j: (j, 0))
        rhs_vmem = 2 * tn * D * in_bytes
        rhs_hbm = grid[0] * Np * D * in_bytes        # re-read once per row strip

    # double-buffered LHS tile + RHS + double-buffered output tile + f32 pre-sigmoid
    vmem_need = (2 * tm * D * in_bytes + rhs_vmem
                 + 2 * tm * tn * out_bytes + tm * tn * 4)
    vmem_limit = min(vmem_cap, max(2 * vmem_need, 32 * 1024 * 1024))

    cost = pl.CostEstimate(
        flops=2 * Np * Np * D,
        transcendentals=Np * Np,                      # one exp per output element
        bytes_accessed=Np * Np * out_bytes + Np * D * in_bytes + rhs_hbm,
    )

    out_p = pl.pallas_call(
        kernel,
        out_shape=jax.ShapeDtypeStruct((Np, Np), out_dtype),
        grid_spec=pltpu.PrefetchScalarGridSpec(
            num_scalar_prefetch=0,
            grid=grid,
            in_specs=[
                pl.BlockSpec((tm, D), lambda i, j: (i, 0)),   # LHS row tile
                rhs_spec,                                     # RHS rows
            ],
            out_specs=pl.BlockSpec((tm, tn), lambda i, j: (i, j)),
        ),
        compiler_params=pltpu.CompilerParams(
            dimension_semantics=("parallel", "parallel"),
            vmem_limit_bytes=vmem_limit,
        ),
        cost_estimate=cost,
    )(x_p, x_p)

    if Np != N:
        # TODO(synk): for ragged N this slice is an extra ~N^2 copy; it is
        # skipped entirely whenever N is a multiple of 128.
        out_p = out_p[:N, :N]
    return out_p


if __name__ == "__main__":
    key = jax.random.PRNGKey(0)
    N, D = 64, 32  # small: 64 nodes, latent dim 32
    x = jax.random.normal(key, (N, D), dtype=jnp.float32)

    ref = jax.nn.sigmoid(x @ x.T)

    # Default path: auto tile clamp, resident RHS (x is tiny), f32 output.
    out = jax.block_until_ready(inner_product_decoder(x))
    assert out.shape == (N, N) and out.dtype == x.dtype
    assert jnp.allclose(out, ref, atol=5e-3, rtol=5e-3)  # approx-reciprocal epilogue

    # Streaming (tiled RHS) path.
    out_t = jax.block_until_ready(inner_product_decoder(x, rhs_resident=False))
    assert jnp.allclose(out_t, ref, atol=5e-3, rtol=5e-3)

    # bf16 output (halves the dominant N^2 HBM write traffic at scale).
    out_bf = jax.block_until_ready(
        inner_product_decoder(x, out_dtype=jnp.bfloat16))
    assert out_bf.dtype == jnp.bfloat16
    assert jnp.allclose(out_bf.astype(jnp.float32), ref, atol=2e-2, rtol=2e-2)

    print("KERNEL_OK")
</pallas_src>

<mosaic_0001>
module attributes {stable_mosaic.version = 11 : i64} {
  func.func @_ipd_kernel_resident(%arg0: i32, %arg1: i32, %arg2: memref<128x32xf32, #tpu.memory_space<vmem>>, %arg3: memref<128x32xf32, #tpu.memory_space<vmem>>, %arg4: memref<128x128xf32, #tpu.memory_space<vmem>>) attributes {dimension_semantics = [#tpu.dimension_semantics<parallel>, #tpu.dimension_semantics<parallel>], iteration_bounds = array<i64: 1, 1>, scalar_prefetch = 0 : i64, scratch_operands = 0 : i64, tpu.core_type = #tpu.core_type<tc>, window_params = [{transform_indices = @transform_0, window_bounds = array<i64: 128, 32>}, {pipeline_mode = #tpu.pipeline_mode<synchronous>, transform_indices = @transform_1, window_bounds = array<i64: 128, 32>}, {transform_indices = @transform_2, window_bounds = array<i64: 128, 128>}]} {
    %c128_i32 = arith.constant 128 : i32
    %0 = arith.muli %arg1, %c128_i32 : i32
    %1 = tpu.assume_multiple %0, 128 : i32
    %2 = arith.index_cast %1 : i32 to index
    %c0 = arith.constant 0 : index
    %3 = vector.load %arg3[%2, %c0] : memref<128x32xf32, #tpu.memory_space<vmem>>, vector<128x32xf32>
    %c0_0 = arith.constant 0 : index
    %c0_1 = arith.constant 0 : index
    %4 = vector.load %arg2[%c0_0, %c0_1] : memref<128x32xf32, #tpu.memory_space<vmem>>, vector<128x32xf32>
    %cst = arith.constant dense<0.000000e+00> : vector<128x128xf32>
    %5 = tpu.matmul %4, %3, %cst {dimension_numbers = #tpu.dot_dimension_numbers<[1], [1], [0], [0], [0, 0, 1, 0], [], []>} : vector<128x32xf32>, vector<128x32xf32>, vector<128x128xf32> -> vector<128x128xf32>
    %cst_2 = arith.constant 0.000000e+00 : f32
    %6 = vector.broadcast %cst_2 : f32 to vector<128x128xf32>
    %7 = arith.subf %6, %5 : vector<128x128xf32>
    %8 = math.exp %7 : vector<128x128xf32>
    %cst_3 = arith.constant 1.000000e+00 : f32
    %9 = vector.broadcast %cst_3 : f32 to vector<128x128xf32>
    %10 = arith.addf %9, %8 : vector<128x128xf32>
    %11 = tpu.reciprocal %10 {approx = true} : vector<128x128xf32> -> vector<128x128xf32>
    %c0_4 = arith.constant 0 : index
    %c0_5 = arith.constant 0 : index
    %12 = vector.load %arg4[%c0_4, %c0_5] : memref<128x128xf32, #tpu.memory_space<vmem>>, vector<128x128xf32>
    tpu.vector_store %arg4[%c0_4, %c0_5], %11 {strides = array<i32>} : memref<128x128xf32, #tpu.memory_space<vmem>>, vector<128x128xf32>,
    return
  }
  func.func @transform_0(%arg0: i32, %arg1: i32) -> (i32, i32) {
    %c0_i32 = arith.constant 0 : i32
    %c0_i32_0 = arith.constant 0 : i32
    return %arg0, %c0_i32 : i32, i32
  }
  func.func @transform_1(%arg0: i32, %arg1: i32) -> (i32, i32) {
    %c0_i32 = arith.constant 0 : i32
    %c0_i32_0 = arith.constant 0 : i32
    %c0_i32_1 = arith.constant 0 : i32
    return %c0_i32, %c0_i32_0 : i32, i32
  }
  func.func @transform_2(%arg0: i32, %arg1: i32) -> (i32, i32) {
    %c0_i32 = arith.constant 0 : i32
    return %arg0, %arg1 : i32, i32
  }
}

</mosaic_0001>

<llo_original>
// kernel: inner_product_decoder.1
$region0: #{inner_product_decoder.1}
  #allocation0 [shape = 'u32[]', space=smem, size = 0x4, offset = 0x4, fixed_abs, tag = 'smem constant byte address 0x4 - core index']
  #allocation1 [shape = 'u32[144,128]{1,0:T(1,128)}', space=vmem, size = 0x12000, scoped, tag = 'internal scratch']
  %s0 = inlined_call_operand.vmem [shape: f32[128,32], index: 0, kind: input, shape index: {}, may-alias: {0,1}]
  %s1 = inlined_call_operand.vmem [shape: f32[128,32], index: 1, kind: input, shape index: {}, may-alias: {0,1}]
  %s2 = inlined_call_operand.vmem [shape: f32[128,128], index: 2, kind: output, shape index: {}]
  %s3 = sld [smem:[#allocation0]]
  $region18: #{inner_product_decoder.1} parent=0
    _
  %s5 = ssub.s32 1, %s3
  %s6 = scalar_select 0, %s5, %s3
  // Predicated region
  $region2: #{inner_product_decoder.1} parent=0 // pred_check
    _
  $region3: #{inner_product_decoder.1} parent=0 // pred_check_branch
    %8 = sbr.rel (0) target = $region5
  $region4: #{inner_product_decoder.1} parent=0 // pred_region
    _
  $region5: #{inner_product_decoder.1} parent=0 // pred_fallthru
    _
  // Predicated region
  $region6: #{inner_product_decoder.1} parent=0 // pred_check
    _
  $region7: #{inner_product_decoder.1} parent=0 // pred_check_branch
    %10 = sbr.rel (0) target = $region9
  $region8: #{inner_product_decoder.1} parent=0 // pred_region
    _
  $region9: #{inner_product_decoder.1} parent=0 // pred_fallthru
    _
  %s11 = smul.u32 0, 128
  %s12 = scalar_lea.vmem %s1, %s11
  %v13 = vld [vmem:[%s12] sm:$0xff]
  %v14 = vld [vmem:[%s12 + $0x8] sm:$0xff]
  %v15 = vld [vmem:[%s12 + $0x10] sm:$0xff]
  %v16 = vld [vmem:[%s12 + $0x18] sm:$0xff]
  %v17 = vld [vmem:[%s12 + $0x20] sm:$0xff]
  %v18 = vld [vmem:[%s12 + $0x28] sm:$0xff]
  %v19 = vld [vmem:[%s12 + $0x30] sm:$0xff]
  %v20 = vld [vmem:[%s12 + $0x38] sm:$0xff]
  %v21 = vld [vmem:[%s12 + $0x40] sm:$0xff]
  %v22 = vld [vmem:[%s12 + $0x48] sm:$0xff]
  %v23 = vld [vmem:[%s12 + $0x50] sm:$0xff]
  %v24 = vld [vmem:[%s12 + $0x58] sm:$0xff]
  %v25 = vld [vmem:[%s12 + $0x60] sm:$0xff]
  %v26 = vld [vmem:[%s12 + $0x68] sm:$0xff]
  %v27 = vld [vmem:[%s12 + $0x70] sm:$0xff]
  %v28 = vld [vmem:[%s12 + $0x78] sm:$0xff]
  %v29 = vld [vmem:[%s0] sm:$0xff]
  %v30 = vld [vmem:[%s0 + $0x8] sm:$0xff]
  %v31 = vld [vmem:[%s0 + $0x10] sm:$0xff]
  %v32 = vld [vmem:[%s0 + $0x18] sm:$0xff]
  %v33 = vld [vmem:[%s0 + $0x20] sm:$0xff]
  %v34 = vld [vmem:[%s0 + $0x28] sm:$0xff]
  %v35 = vld [vmem:[%s0 + $0x30] sm:$0xff]
  %v36 = vld [vmem:[%s0 + $0x38] sm:$0xff]
  %v37 = vld [vmem:[%s0 + $0x40] sm:$0xff]
  %v38 = vld [vmem:[%s0 + $0x48] sm:$0xff]
  %v39 = vld [vmem:[%s0 + $0x50] sm:$0xff]
  %v40 = vld [vmem:[%s0 + $0x58] sm:$0xff]
  %v41 = vld [vmem:[%s0 + $0x60] sm:$0xff]
  %v42 = vld [vmem:[%s0 + $0x68] sm:$0xff]
  %v43 = vld [vmem:[%s0 + $0x70] sm:$0xff]
  %v44 = vld [vmem:[%s0 + $0x78] sm:$0xff]
  %vm45 = vcmask 261120
  %v47 = vsel %vm45, %v29, 0
  %v50 = vsel %vm45, %v30, 0
  %v53 = vsel %vm45, %v31, 0
  %v56 = vsel %vm45, %v32, 0
  %v59 = vsel %vm45, %v33, 0
  %v62 = vsel %vm45, %v34, 0
  %v65 = vsel %vm45, %v35, 0
  %v68 = vsel %vm45, %v36, 0
  %v71 = vsel %vm45, %v37, 0
  %v74 = vsel %vm45, %v38, 0
  %v77 = vsel %vm45, %v39, 0
  %v80 = vsel %vm45, %v40, 0
  %v83 = vsel %vm45, %v41, 0
  %v86 = vsel %vm45, %v42, 0
  %v89 = vsel %vm45, %v43, 0
  %v92 = vsel %vm45, %v44, 0
  %v95 = vsel %vm45, %v13, 0
  %v98 = vsel %vm45, %v14, 0
  %v101 = vsel %vm45, %v15, 0
  %v104 = vsel %vm45, %v16, 0
  %v107 = vsel %vm45, %v17, 0
  %v110 = vsel %vm45, %v18, 0
  %v113 = vsel %vm45, %v19, 0
  %v116 = vsel %vm45, %v20, 0
  %v119 = vsel %vm45, %v21, 0
  %v122 = vsel %vm45, %v22, 0
  %v125 = vsel %vm45, %v23, 0
  %v128 = vsel %vm45, %v24, 0
  %v131 = vsel %vm45, %v25, 0
  %v134 = vsel %vm45, %v26, 0
  %v137 = vsel %vm45, %v27, 0
  %v140 = vsel %vm45, %v28, 0
  %142 = vmatprep.subr.mxu0 0.0
  %143 = vmatpush1.xpose.msra.mxu0 %v140
  %144 = vmatprep.subr.mxu0 0.0
  %145 = vmatpush1.xpose.msra.mxu0 %v137
  %146 = vmatprep.subr.mxu0 0.0
  %147 = vmatpush1.xpose.msra.mxu0 %v134
  %148 = vmatprep.subr.mxu0 0.0
  %149 = vmatpush1.xpose.msra.mxu0 %v131
  %150 = vmatprep.subr.mxu0 0.0
  %151 = vmatpush1.xpose.msra.mxu0 %v128
  %152 = vmatprep.subr.mxu0 0.0
  %153 = vmatpush1.xpose.msra.mxu0 %v125
  %154 = vmatprep.subr.mxu0 0.0
  %155 = vmatpush1.xpose.msra.mxu0 %v122
  %156 = vmatprep.subr.mxu0 0.0
  %157 = vmatpush1.xpose.msra.mxu0 %v119
  %158 = vmatprep.subr.mxu0 0.0
  %159 = vmatpush1.xpose.msra.mxu0 %v116
  %160 = vmatprep.subr.mxu0 0.0
  %161 = vmatpush1.xpose.msra.mxu0 %v113
  %162 = vmatprep.subr.mxu0 0.0
  %163 = vmatpush1.xpose.msra.mxu0 %v110
  %164 = vmatprep.subr.mxu0 0.0
  %165 = vmatpush1.xpose.msra.mxu0 %v107
  %166 = vmatprep.subr.mxu0 0.0
  %167 = vmatpush1.xpose.msra.mxu0 %v104
  %168 = vmatprep.subr.mxu0 0.0
  %169 = vmatpush1.xpose.msra.mxu0 %v101
  %170 = vmatprep.subr.mxu0 0.0
  %171 = vmatpush1.xpose.msra.mxu0 %v98
  %172 = vmatprep.subr.mxu0 0.0
  %173 = vmatpush1.xpose.msra.mxu0 %v95
  %174 = vmatprep.subr.mxu0 0.0
  %175 = vmatpush2.xpose.msra.mxu0 0.0
  %176 = vmatprep.subr.mxu0 0.0
  %177 = vmatpush2.xpose.msra.mxu0 0.0
  %178 = vmatprep.subr.mxu0 0.0
  %179 = vmatpush2.xpose.msra.mxu0 0.0
  %180 = vmatprep.subr.mxu0 0.0
  %181 = vmatpush2.xpose.msra.mxu0 0.0
  %182 = vmatprep.subr.mxu0 0.0
  %183 = vmatpush2.xpose.msra.mxu0 0.0
  %184 = vmatprep.subr.mxu0 0.0
  %185 = vmatpush2.xpose.msra.mxu0 0.0
  %186 = vmatprep.subr.mxu0 0.0
  %187 = vmatpush2.xpose.msra.mxu0 0.0
  %188 = vmatprep.subr.mxu0 0.0
  %189 = vmatpush2.xpose.msra.mxu0 0.0
  %190 = vmatprep.subr.mxu0 0.0
  %191 = vmatpush2.xpose.msra.mxu0 0.0
  %192 = vmatprep.subr.mxu0 0.0
  %193 = vmatpush2.xpose.msra.mxu0 0.0
  %194 = vmatprep.subr.mxu0 0.0
  %195 = vmatpush2.xpose.msra.mxu0 0.0
  %196 = vmatprep.subr.mxu0 0.0
  %197 = vmatpush2.xpose.msra.mxu0 0.0
  %198 = vmatprep.subr.mxu0 0.0
  %199 = vmatpush2.xpose.msra.mxu0 0.0
  %200 = vmatprep.subr.mxu0 0.0
  %201 = vmatpush2.xpose.msra.mxu0 0.0
  %202 = vmatprep.subr.mxu0 0.0
  %203 = vmatpush2.xpose.msra.mxu0 0.0
  %204 = vmatprep.subr.mxu0 0.0
  %205 = vmatpush2.xpose.msra.mxu0 0.0
  %206 = vmatprep.mubr.f32.mxu0 0.0
  %207 = vmatmul.mubr.f32.gmra.mxu0 %v47
  %v208 = vpop.f32.mrf.mxu0
  %v209 = vadd.f32 0.0, %v208
  %v210 = vpop.f32.mrf.mxu0
  %211 = vmatprep.mubr.f32.mxu0 0.0
  %212 = vmatmul.mubr.f32.gmra.mxu0 %v50
  %v213 = vpop.f32.mrf.mxu0
  %v214 = vadd.f32 0.0, %v213
  %v215 = vpop.f32.mrf.mxu0
  %216 = vmatprep.mubr.f32.mxu0 0.0
  %217 = vmatmul.mubr.f32.gmra.mxu0 %v53
  %v218 = vpop.f32.mrf.mxu0
  %v219 = vadd.f32 0.0, %v218
  %v220 = vpop.f32.mrf.mxu0
  %221 = vmatprep.mubr.f32.mxu0 0.0
  %222 = vmatmul.mubr.f32.gmra.mxu0 %v56
  %v223 = vpop.f32.mrf.mxu0
  %v224 = vadd.f32 0.0, %v223
  %v225 = vpop.f32.mrf.mxu0
  %226 = vmatprep.mubr.f32.mxu0 0.0
  %227 = vmatmul.mubr.f32.gmra.mxu0 %v59
  %v228 = vpop.f32.mrf.mxu0
  %v229 = vadd.f32 0.0, %v228
  %v230 = vpop.f32.mrf.mxu0
  %231 = vmatprep.mubr.f32.mxu0 0.0
  %232 = vmatmul.mubr.f32.gmra.mxu0 %v62
  %v233 = vpop.f32.mrf.mxu0
  %v234 = vadd.f32 0.0, %v233
  %v235 = vpop.f32.mrf.mxu0
  %236 = vmatprep.mubr.f32.mxu0 0.0
  %237 = vmatmul.mubr.f32.gmra.mxu0 %v65
  %v238 = vpop.f32.mrf.mxu0
  %v239 = vadd.f32 0.0, %v238
  %v240 = vpop.f32.mrf.mxu0
  %241 = vmatprep.mubr.f32.mxu0 0.0
  %242 = vmatmul.mubr.f32.gmra.mxu0 %v68
  %v243 = vpop.f32.mrf.mxu0
  %v244 = vadd.f32 0.0, %v243
  %v245 = vpop.f32.mrf.mxu0
  %246 = vmatprep.mubr.f32.mxu0 0.0
  %247 = vmatmul.mubr.f32.gmra.mxu0 %v71
  %v248 = vpop.f32.mrf.mxu0
  %v249 = vadd.f32 0.0, %v248
  %v250 = vpop.f32.mrf.mxu0
  %251 = vmatprep.mubr.f32.mxu0 0.0
  %252 = vmatmul.mubr.f32.gmra.mxu0 %v74
  %v253 = vpop.f32.mrf.mxu0
  %v254 = vadd.f32 0.0, %v253
  %v255 = vpop.f32.mrf.mxu0
  %256 = vmatprep.mubr.f32.mxu0 0.0
  %257 = vmatmul.mubr.f32.gmra.mxu0 %v77
  %v258 = vpop.f32.mrf.mxu0
  %v259 = vadd.f32 0.0, %v258
  %v260 = vpop.f32.mrf.mxu0
  %261 = vmatprep.mubr.f32.mxu0 0.0
  %262 = vmatmul.mubr.f32.gmra.mxu0 %v80
  %v263 = vpop.f32.mrf.mxu0
  %v264 = vadd.f32 0.0, %v263
  %v265 = vpop.f32.mrf.mxu0
  %266 = vmatprep.mubr.f32.mxu0 0.0
  %267 = vmatmul.mubr.f32.gmra.mxu0 %v83
  %v268 = vpop.f32.mrf.mxu0
  %v269 = vadd.f32 0.0, %v268
  %v270 = vpop.f32.mrf.mxu0
  %271 = vmatprep.mubr.f32.mxu0 0.0
  %272 = vmatmul.mubr.f32.gmra.mxu0 %v86
  %v273 = vpop.f32.mrf.mxu0
  %v274 = vadd.f32 0.0, %v273
  %v275 = vpop.f32.mrf.mxu0
  %276 = vmatprep.mubr.f32.mxu0 0.0
  %277 = vmatmul.mubr.f32.gmra.mxu0 %v89
  %v278 = vpop.f32.mrf.mxu0
  %v279 = vadd.f32 0.0, %v278
  %v280 = vpop.f32.mrf.mxu0
  %281 = vmatprep.mubr.f32.mxu0 0.0
  %282 = vmatmul.mubr.f32.gmra.mxu0 %v92
  %v283 = vpop.f32.mrf.mxu0
  %v284 = vadd.f32 0.0, %v283
  %v285 = vpop.f32.mrf.mxu0
  %286 = vdwg.mxu0
  %v287 = vsub.f32 0.0, %v209
  %v288 = vsub.f32 0.0, %v214
  %v289 = vsub.f32 0.0, %v219
  %v290 = vsub.f32 0.0, %v224
  %v291 = vsub.f32 0.0, %v229
  %v292 = vsub.f32 0.0, %v234
  %v293 = vsub.f32 0.0, %v239
  %v294 = vsub.f32 0.0, %v244
  %v295 = vsub.f32 0.0, %v249
  %v296 = vsub.f32 0.0, %v254
  %v297 = vsub.f32 0.0, %v259
  %v298 = vsub.f32 0.0, %v264
  %v299 = vsub.f32 0.0, %v269
  %v300 = vsub.f32 0.0, %v274
  %v301 = vsub.f32 0.0, %v279
  %v302 = vsub.f32 0.0, %v284
  %v303 = vmul.f32 %v287, 1.442695
  %v304 = vpow.pop %v303
  %v305 = vmul.f32 %v288, 1.442695
  %v306 = vpow.pop %v305
  %v307 = vmul.f32 %v289, 1.442695
  %v308 = vpow.pop %v307
  %v309 = vmul.f32 %v290, 1.442695
  %v310 = vpow.pop %v309
  %v311 = vmul.f32 %v291, 1.442695
  %v312 = vpow.pop %v311
  %v313 = vmul.f32 %v292, 1.442695
  %v314 = vpow.pop %v313
  %v315 = vmul.f32 %v293, 1.442695
  %v316 = vpow.pop %v315
  %v317 = vmul.f32 %v294, 1.442695
  %v318 = vpow.pop %v317
  %v319 = vmul.f32 %v295, 1.442695
  %v320 = vpow.pop %v319
  %v321 = vmul.f32 %v296, 1.442695
  %v322 = vpow.pop %v321
  %v323 = vmul.f32 %v297, 1.442695
  %v324 = vpow.pop %v323
  %v325 = vmul.f32 %v298, 1.442695
  %v326 = vpow.pop %v325
  %v327 = vmul.f32 %v299, 1.442695
  %v328 = vpow.pop %v327
  %v329 = vmul.f32 %v300, 1.442695
  %v330 = vpow.pop %v329
  %v331 = vmul.f32 %v301, 1.442695
  %v332 = vpow.pop %v331
  %v333 = vmul.f32 %v302, 1.442695
  %v334 = vpow.pop %v333
  %v335 = vadd.f32 %v304, 1.0
  %v336 = vadd.f32 %v306, 1.0
  %v337 = vadd.f32 %v308, 1.0
  %v338 = vadd.f32 %v310, 1.0
  %v339 = vadd.f32 %v312, 1.0
  %v340 = vadd.f32 %v314, 1.0
  %v341 = vadd.f32 %v316, 1.0
  %v342 = vadd.f32 %v318, 1.0
  %v343 = vadd.f32 %v320, 1.0
  %v344 = vadd.f32 %v322, 1.0
  %v345 = vadd.f32 %v324, 1.0
  %v346 = vadd.f32 %v326, 1.0
  %v347 = vadd.f32 %v328, 1.0
  %v348 = vadd.f32 %v330, 1.0
  %v349 = vadd.f32 %v332, 1.0
  %v350 = vadd.f32 %v334, 1.0
  %v351 = vrcp.pop %v335
  %v352 = vrcp.pop %v336
  %v353 = vrcp.pop %v337
  %v354 = vrcp.pop %v338
  %v355 = vrcp.pop %v339
  %v356 = vrcp.pop %v340
  %v357 = vrcp.pop %v341
  %v358 = vrcp.pop %v342
  %v359 = vrcp.pop %v343
  %v360 = vrcp.pop %v344
  %v361 = vrcp.pop %v345
  %v362 = vrcp.pop %v346
  %v363 = vrcp.pop %v347
  %v364 = vrcp.pop %v348
  %v365 = vrcp.pop %v349
  %v366 = vrcp.pop %v350
  %367 = vst [vmem:[%s2] sm:$0xff] %v351
  %368 = vst [vmem:[%s2 + $0x8] sm:$0xff] %v352
  %369 = vst [vmem:[%s2 + $0x10] sm:$0xff] %v353
  %370 = vst [vmem:[%s2 + $0x18] sm:$0xff] %v354
  %371 = vst [vmem:[%s2 + $0x20] sm:$0xff] %v355
  %372 = vst [vmem:[%s2 + $0x28] sm:$0xff] %v356
  %373 = vst [vmem:[%s2 + $0x30] sm:$0xff] %v357
  %374 = vst [vmem:[%s2 + $0x38] sm:$0xff] %v358
  %375 = vst [vmem:[%s2 + $0x40] sm:$0xff] %v359
  %376 = vst [vmem:[%s2 + $0x48] sm:$0xff] %v360
  %377 = vst [vmem:[%s2 + $0x50] sm:$0xff] %v361
  %378 = vst [vmem:[%s2 + $0x58] sm:$0xff] %v362
  %379 = vst [vmem:[%s2 + $0x60] sm:$0xff] %v363
  %380 = vst [vmem:[%s2 + $0x68] sm:$0xff] %v364
  %381 = vst [vmem:[%s2 + $0x70] sm:$0xff] %v365
  %382 = vst [vmem:[%s2 + $0x78] sm:$0xff] %v366
  // Predicated region
  $region10: #{inner_product_decoder.1} parent=0 // pred_check
    _
  $region11: #{inner_product_decoder.1} parent=0 // pred_check_branch
    %384 = sbr.rel (0) target = $region13
  $region12: #{inner_product_decoder.1} parent=0 // pred_region
    _
  $region13: #{inner_product_decoder.1} parent=0 // pred_fallthru
    _
  // Predicated region
  $region14: #{inner_product_decoder.1} parent=0 // pred_check
    _
  $region15: #{inner_product_decoder.1} parent=0 // pred_check_branch
    %386 = sbr.rel (0) target = $region17
  $region16: #{inner_product_decoder.1} parent=0 // pred_region
    _
  $region17: #{inner_product_decoder.1} parent=0 // pred_fallthru
    _

</llo_original>
